<compile_context>
chip_gen: v5e
topology: v5e:2x2
jax: 0.10.0
libtpu: 0.0.40
codegen_flags: <defaults>
</compile_context>

<pallas_src>
import functools

import jax
import jax.numpy as jnp
import numpy as np
from jax.experimental import pallas as pl
from jax.experimental.pallas import tpu as pltpu


def _focal_loss_kernel(logp_ref, tgt_ref, w_ref, num_ref, den_ref, *,
                       gamma, hw, tm, needs_mask, accumulate):
    """One grid step processes a (bn, C, tm) tile.

    logp_ref : (bn, C, tm) f32/bf16  log-probabilities (classes on sublanes)
    tgt_ref  : (bn, 1, tm) i32       target class per element
    w_ref    : (C, 1)      f32       per-class weights
    num_ref  : (bn, tm)    f32       per-lane partial numerator
    den_ref  : (bn, tm)    f32       per-lane partial denominator
    """
    if accumulate:
        @pl.when(pl.program_id(1) == 0)
        def _():
            num_ref[...] = jnp.zeros_like(num_ref)
            den_ref[...] = jnp.zeros_like(den_ref)

    x = logp_ref[...]                                              # (bn, C, tm)
    tgt = tgt_ref[...]                                             # (bn, 1, tm)
    w = w_ref[...]                                                 # (C, 1)

    # Gather the target log-prob / weight first (boolean selects, no float-mask
    # multiply) so the focal math only runs on a (bn, tm) vector.
    sel = jax.lax.broadcasted_iota(jnp.int32, x.shape, 1) == tgt   # (bn, C, tm)
    picked = jnp.sum(jnp.where(sel, x, 0.0), axis=1).astype(jnp.float32)  # (bn, tm)
    w_elem = jnp.sum(jnp.where(sel, w, 0.0), axis=1)               # (bn, tm) f32

    if needs_mask:
        # Zero padded lanes of the last partial tile BEFORE exp(): garbage HBM
        # reads there could otherwise turn into inf/NaN.
        col = jax.lax.broadcasted_iota(jnp.int32, picked.shape, 1)
        valid = col < (hw - pl.program_id(1) * tm)
        picked = jnp.where(valid, picked, 0.0)
        w_elem = jnp.where(valid, w_elem, 0.0)

    # focal = (1 - pt)^gamma * log(pt), with log(pt) == picked (no exp/log
    # round-trip) and integer gamma lowered to plain multiplies.
    g = float(gamma)
    if g == 0.0:
        focal = picked
    else:
        pt = jnp.exp(picked)
        # Guard pt > 1 from rounding (reference would NaN on a negative base).
        one_m = jnp.maximum(1.0 - pt, 0.0)
        if g.is_integer() and 1.0 <= g <= 16.0:
            factor = one_m
            for _ in range(int(g) - 1):
                factor = factor * one_m
        else:
            factor = jnp.power(one_m, g)
        focal = factor * picked

    if accumulate:
        num_ref[...] += -w_elem * focal
        den_ref[...] += w_elem
    else:
        num_ref[...] = -w_elem * focal
        den_ref[...] = w_elem


def _round_up(x, m):
    return ((x + m - 1) // m) * m


def focal_loss(log_probs, target, *, gamma, weight,
               target_block_bytes=4 * 1024 * 1024, max_tm=128 * 1024):
    """log_probs: [N, C, *spatial] (f32 or bf16) log-probabilities,
    target: [N, *spatial] ints in [0, C), weight: [C] per-class weights.
    Matches FocalLoss(gamma, weight, reduction='mean')."""
    N, C = int(log_probs.shape[0]), int(log_probs.shape[1])
    hw = 1
    for d in log_probs.shape[2:]:
        hw *= int(d)

    # Keep bf16 inputs in bf16 (halves the dominant HBM read stream); anything
    # else is promoted to f32.  Post-gather math is always f32 in the kernel.
    if log_probs.dtype == jnp.bfloat16:
        logp_3d = log_probs.reshape(N, C, hw)
        itemsize = 2
    else:
        logp_3d = log_probs.reshape(N, C, hw).astype(jnp.float32)
        itemsize = 4
    # TODO(synk): targets could be shipped as int8 (values < 128) and widened
    # in-kernel to shave ~20% of HBM bytes for tiny C; kept int32 for robust
    # lowering of the (bn, 1, tm) block.
    tgt_3d = target.reshape(N, 1, hw).astype(jnp.int32)
    w_2d = jnp.asarray(weight, jnp.float32).reshape(C, 1)

    # Lane tile scaled with C / itemsize so one grid step moves roughly
    # target_block_bytes of log-probs (>= ~1 MiB blocks reach 85%+ of the HBM
    # roofline; tiny fixed tiles are per-step-overhead bound).
    hw_pad = _round_up(hw, 128)
    tm = max(128, (target_block_bytes // (itemsize * C)) // 128 * 128)
    tm = min(tm, max_tm, hw_pad)

    # If the whole (padded) spatial extent fits in one lane tile, block several
    # batch elements per grid step to keep the per-step bytes up.  Keep
    # N // bn >= 2 so the batch grid axis can still megacore-split (v7x).
    bn = 1
    if tm >= hw_pad:
        tm = hw_pad
        per_batch = C * hw_pad * itemsize
        bn_cap = max(1, target_block_bytes // per_batch)
        if N >= 2:
            bn_cap = min(bn_cap, N // 2)
        bn_cap = max(1, min(bn_cap, N))
        for cand in range(bn_cap, 0, -1):
            if N % cand == 0:
                bn = cand
                break

    G = N // bn
    n_tiles = pl.cdiv(hw, tm)
    needs_mask = (hw % tm) != 0

    # With a single batch block (e.g. N == 1), parallelise over spatial tiles
    # instead (per-tile partial outputs) so both v7x TensorCores stay busy.
    spatial_parallel = (G == 1 and n_tiles > 1)
    t_out = n_tiles if spatial_parallel else 1

    kernel = functools.partial(
        _focal_loss_kernel, gamma=float(gamma), hw=hw, tm=tm,
        needs_mask=needs_mask, accumulate=not spatial_parallel)

    if spatial_parallel:
        out_idx = lambda n, i: (n, i, 0, 0)
        semantics = ("arbitrary", "parallel")
    else:
        out_idx = lambda n, i: (n, 0, 0, 0)
        semantics = ("parallel", "arbitrary")

    # VMEM estimate: double-buffered inputs + output partials.  Only raise the
    # scoped limit when the estimate actually needs it (v5e default 16 MiB);
    # cap at 48 MiB to keep headroom on v7x (64 MiB physical).
    est = (2 * itemsize * bn * C * tm      # log-probs, double-buffered
           + 2 * 4 * bn * tm               # targets, double-buffered
           + 2 * 2 * 4 * bn * tm           # num/den partials
           + 2 * 4 * C)                    # weights
    vmem_limit = None
    if 2 * est > 16 * 1024 * 1024:
        vmem_limit = int(min(max(2 * est, 32 * 1024 * 1024), 48 * 1024 * 1024))

    num_parts, den_parts = pl.pallas_call(
        kernel,
        out_shape=(
            jax.ShapeDtypeStruct((G, t_out, bn, tm), jnp.float32),
            jax.ShapeDtypeStruct((G, t_out, bn, tm), jnp.float32),
        ),
        grid_spec=pltpu.PrefetchScalarGridSpec(
            num_scalar_prefetch=0,
            grid=(G, n_tiles),
            in_specs=[
                pl.BlockSpec((bn, C, tm), lambda n, i: (n, 0, i)),
                pl.BlockSpec((bn, 1, tm), lambda n, i: (n, 0, i)),
                pl.BlockSpec((C, 1), lambda n, i: (0, 0)),   # constant block
            ],
            out_specs=(
                pl.BlockSpec((None, None, bn, tm), out_idx),
                pl.BlockSpec((None, None, bn, tm), out_idx),
            ),
        ),
        compiler_params=pltpu.CompilerParams(
            dimension_semantics=semantics,
            vmem_limit_bytes=vmem_limit,
        ),
    )(logp_3d, tgt_3d, w_2d)

    # Tiny scalar epilogue: global sums + division.
    return jnp.sum(num_parts) / jnp.sum(den_parts)


def focal_loss_ref(log_probs, target, *, gamma, weight):
    """Pure-JAX reference mirroring the PyTorch module."""
    C = log_probs.shape[1]
    pt = jnp.exp(log_probs)
    focal = jnp.power(1.0 - pt, gamma) * jnp.log(pt)
    one_hot = jax.nn.one_hot(target, C, axis=1, dtype=jnp.float32)
    w_b = weight.reshape([1, C] + [1] * (log_probs.ndim - 2))
    num = jnp.sum(one_hot * (-focal) * w_b)
    den = jnp.sum(one_hot * w_b)
    return num / den


if __name__ == "__main__":
    key = jax.random.PRNGKey(0)
    k1, k2, k3 = jax.random.split(key, 3)

    C = 4
    # deterministic "module parameters": per-class weights
    weight = jax.random.uniform(k3, (C,), dtype=jnp.float32, minval=0.5, maxval=1.5)

    # Case 1: NCHW f32, gamma=2 (accumulating path, aligned spatial size).
    N, H, W = 2, 16, 16
    logits = jax.random.normal(k1, (N, C, H, W), dtype=jnp.float32)
    log_probs = jax.nn.log_softmax(logits, axis=1)
    target = jax.random.randint(k2, (N, H, W), 0, C, dtype=jnp.int32)
    loss = jax.block_until_ready(focal_loss(log_probs, target, gamma=2.0, weight=weight))
    ref = focal_loss_ref(log_probs, target, gamma=2.0, weight=weight)
    np.testing.assert_allclose(np.asarray(loss), np.asarray(ref), rtol=1e-4, atol=1e-6)

    # Case 2: non-128-aligned spatial size (padded-lane masking) and gamma=0
    # (NLL-loss behaviour).
    H2, W2 = 12, 12
    logits2 = jax.random.normal(k1, (N, C, H2, W2), dtype=jnp.float32)
    log_probs2 = jax.nn.log_softmax(logits2, axis=1)
    target2 = jax.random.randint(k2, (N, H2, W2), 0, C, dtype=jnp.int32)
    loss2 = jax.block_until_ready(
        focal_loss(log_probs2, target2, gamma=0.0, weight=weight))
    ref2 = focal_loss_ref(log_probs2, target2, gamma=0.0, weight=weight)
    np.testing.assert_allclose(np.asarray(loss2), np.asarray(ref2), rtol=1e-4, atol=1e-6)

    # Case 3: larger batch with small images -> batch blocking (bn > 1), gamma=3.
    N3 = 8
    logits3 = jax.random.normal(k1, (N3, C, H, W), dtype=jnp.float32)
    log_probs3 = jax.nn.log_softmax(logits3, axis=1)
    target3 = jax.random.randint(k2, (N3, H, W), 0, C, dtype=jnp.int32)
    loss3 = jax.block_until_ready(
        focal_loss(log_probs3, target3, gamma=3.0, weight=weight))
    ref3 = focal_loss_ref(log_probs3, target3, gamma=3.0, weight=weight)
    np.testing.assert_allclose(np.asarray(loss3), np.asarray(ref3), rtol=1e-4, atol=1e-6)

    # Case 4: bf16 log-probs, N=1 flat [N, C, L] input, small block-bytes to
    # force multiple spatial tiles (spatial-parallel / per-tile partials path).
    L = 1024
    logits4 = jax.random.normal(k1, (1, C, L), dtype=jnp.float32)
    log_probs4 = jax.nn.log_softmax(logits4, axis=1).astype(jnp.bfloat16)
    target4 = jax.random.randint(k2, (1, L), 0, C, dtype=jnp.int32)
    loss4 = jax.block_until_ready(
        focal_loss(log_probs4, target4, gamma=2.0, weight=weight,
                   target_block_bytes=2048))
    ref4 = focal_loss_ref(log_probs4.astype(jnp.float32), target4,
                          gamma=2.0, weight=weight)
    np.testing.assert_allclose(np.asarray(loss4), np.asarray(ref4), rtol=1e-4, atol=1e-6)

    print("KERNEL_OK")
</pallas_src>

<mosaic_0001>
module attributes {stable_mosaic.version = 11 : i64} {
  func.func @_focal_loss_kernel(%arg0: i32, %arg1: i32, %arg2: memref<1x4x256xf32, #tpu.memory_space<vmem>>, %arg3: memref<1x1x256xi32, #tpu.memory_space<vmem>>, %arg4: memref<4x1xf32, #tpu.memory_space<vmem>>, %arg5: memref<1x1x1x256xf32, #tpu.memory_space<vmem>>, %arg6: memref<1x1x1x256xf32, #tpu.memory_space<vmem>>) attributes {dimension_semantics = [#tpu.dimension_semantics<parallel>, #tpu.dimension_semantics<arbitrary>], iteration_bounds = array<i64: 2, 1>, scalar_prefetch = 0 : i64, scratch_operands = 0 : i64, tpu.core_type = #tpu.core_type<tc>, window_params = [{transform_indices = @transform_0, window_bounds = array<i64: 1, 4, 256>}, {transform_indices = @transform_1, window_bounds = array<i64: 1, 1, 256>}, {pipeline_mode = #tpu.pipeline_mode<synchronous>, transform_indices = @transform_2, window_bounds = array<i64: 4, 1>}, {transform_indices = @transform_3, window_bounds = array<i64: 1, 1, 1, 256>}, {transform_indices = @transform_4, window_bounds = array<i64: 1, 1, 1, 256>}]} {
    %c0_i32 = arith.constant 0 : i32
    %0 = arith.cmpi eq, %arg1, %c0_i32 : i32
    %1 = arith.extui %0 : i1 to i32
    %c0_i32_0 = arith.constant 0 : i32
    %2 = arith.cmpi ne, %1, %c0_i32_0 : i32
    scf.if %2 {
      %cst_30 = arith.constant 0.000000e+00 : f32
      %39 = vector.broadcast %cst_30 : f32 to vector<1x256xf32>
      %c0_31 = arith.constant 0 : index
      %c0_32 = arith.constant 0 : index
      %c0_33 = arith.constant 0 : index
      %c0_34 = arith.constant 0 : index
      %40 = vector.load %arg5[%c0_31, %c0_32, %c0_33, %c0_34] : memref<1x1x1x256xf32, #tpu.memory_space<vmem>>, vector<1x1x1x256xf32>
      %41 = vector.shape_cast %40 : vector<1x1x1x256xf32> to vector<1x256xf32>
      %42 = vector.shape_cast %39 : vector<1x256xf32> to vector<1x1x1x256xf32>
      tpu.vector_store %arg5[%c0_31, %c0_32, %c0_33, %c0_34], %42 {strides = array<i32>} : memref<1x1x1x256xf32, #tpu.memory_space<vmem>>, vector<1x1x1x256xf32>,
      %cst_35 = arith.constant 0.000000e+00 : f32
      %43 = vector.broadcast %cst_35 : f32 to vector<1x256xf32>
      %c0_36 = arith.constant 0 : index
      %c0_37 = arith.constant 0 : index
      %c0_38 = arith.constant 0 : index
      %c0_39 = arith.constant 0 : index
      %44 = vector.load %arg6[%c0_36, %c0_37, %c0_38, %c0_39] : memref<1x1x1x256xf32, #tpu.memory_space<vmem>>, vector<1x1x1x256xf32>
      %45 = vector.shape_cast %44 : vector<1x1x1x256xf32> to vector<1x256xf32>
      %46 = vector.shape_cast %43 : vector<1x256xf32> to vector<1x1x1x256xf32>
      tpu.vector_store %arg6[%c0_36, %c0_37, %c0_38, %c0_39], %46 {strides = array<i32>} : memref<1x1x1x256xf32, #tpu.memory_space<vmem>>, vector<1x1x1x256xf32>,
    } else {
    }
    %c0 = arith.constant 0 : index
    %c0_1 = arith.constant 0 : index
    %c0_2 = arith.constant 0 : index
    %3 = vector.load %arg2[%c0, %c0_1, %c0_2] : memref<1x4x256xf32, #tpu.memory_space<vmem>>, vector<1x4x256xf32>
    %c0_3 = arith.constant 0 : index
    %c0_4 = arith.constant 0 : index
    %c0_5 = arith.constant 0 : index
    %4 = vector.load %arg3[%c0_3, %c0_4, %c0_5] : memref<1x1x256xi32, #tpu.memory_space<vmem>>, vector<1x1x256xi32>
    %c0_6 = arith.constant 0 : index
    %c0_7 = arith.constant 0 : index
    %5 = vector.load %arg4[%c0_6, %c0_7] : memref<4x1xf32, #tpu.memory_space<vmem>>, vector<4x1xf32>
    %6 = tpu.iota {dimensions = array<i32: 1>} : vector<1x4x256xi32>
    %7 = vector.broadcast %4 : vector<1x1x256xi32> to vector<1x4x256xi32>
    %8 = arith.cmpi eq, %6, %7 : vector<1x4x256xi32>
    %cst = arith.constant 0.000000e+00 : f32
    %9 = vector.broadcast %cst : f32 to vector<1x4x256xf32>
    %10 = arith.select %8, %3, %9 : vector<1x4x256xi1>, vector<1x4x256xf32>
    %cst_8 = arith.constant dense<0.000000e+00> : vector<1x256xf32>
    %11 = vector.multi_reduction <add>, %10, %cst_8 [1] : vector<1x4x256xf32> to vector<1x256xf32>
    %cst_9 = arith.constant 0.000000e+00 : f32
    %12 = vector.shape_cast %5 : vector<4x1xf32> to vector<1x4x1xf32>
    %13 = vector.broadcast %12 : vector<1x4x1xf32> to vector<1x4x256xf32>
    %14 = vector.broadcast %cst_9 : f32 to vector<1x4x256xf32>
    %15 = arith.select %8, %13, %14 : vector<1x4x256xi1>, vector<1x4x256xf32>
    %cst_10 = arith.constant dense<0.000000e+00> : vector<1x256xf32>
    %16 = vector.multi_reduction <add>, %15, %cst_10 [1] : vector<1x4x256xf32> to vector<1x256xf32>
    %17 = math.exp %11 : vector<1x256xf32>
    %cst_11 = arith.constant 1.000000e+00 : f32
    %18 = vector.broadcast %cst_11 : f32 to vector<1x256xf32>
    %19 = arith.subf %18, %17 : vector<1x256xf32>
    %cst_12 = arith.constant 0.000000e+00 : f32
    %20 = vector.broadcast %cst_12 : f32 to vector<1x256xf32>
    %21 = arith.maximumf %19, %20 : vector<1x256xf32>
    %22 = arith.mulf %21, %21 : vector<1x256xf32>
    %23 = arith.mulf %22, %11 : vector<1x256xf32>
    %c0_13 = arith.constant 0 : index
    %c0_14 = arith.constant 0 : index
    %c0_15 = arith.constant 0 : index
    %c0_16 = arith.constant 0 : index
    %24 = vector.load %arg5[%c0_13, %c0_14, %c0_15, %c0_16] : memref<1x1x1x256xf32, #tpu.memory_space<vmem>>, vector<1x1x1x256xf32>
    %25 = vector.shape_cast %24 : vector<1x1x1x256xf32> to vector<1x256xf32>
    %cst_17 = arith.constant 0.000000e+00 : f32
    %26 = vector.broadcast %cst_17 : f32 to vector<1x256xf32>
    %27 = arith.subf %26, %16 : vector<1x256xf32>
    %28 = arith.mulf %27, %23 : vector<1x256xf32>
    %29 = arith.addf %25, %28 : vector<1x256xf32>
    %c0_18 = arith.constant 0 : index
    %c0_19 = arith.constant 0 : index
    %c0_20 = arith.constant 0 : index
    %c0_21 = arith.constant 0 : index
    %30 = vector.load %arg5[%c0_18, %c0_19, %c0_20, %c0_21] : memref<1x1x1x256xf32, #tpu.memory_space<vmem>>, vector<1x1x1x256xf32>
    %31 = vector.shape_cast %30 : vector<1x1x1x256xf32> to vector<1x256xf32>
    %32 = vector.shape_cast %29 : vector<1x256xf32> to vector<1x1x1x256xf32>
    tpu.vector_store %arg5[%c0_18, %c0_19, %c0_20, %c0_21], %32 {strides = array<i32>} : memref<1x1x1x256xf32, #tpu.memory_space<vmem>>, vector<1x1x1x256xf32>,
    %c0_22 = arith.constant 0 : index
    %c0_23 = arith.constant 0 : index
    %c0_24 = arith.constant 0 : index
    %c0_25 = arith.constant 0 : index
    %33 = vector.load %arg6[%c0_22, %c0_23, %c0_24, %c0_25] : memref<1x1x1x256xf32, #tpu.memory_space<vmem>>, vector<1x1x1x256xf32>
    %34 = vector.shape_cast %33 : vector<1x1x1x256xf32> to vector<1x256xf32>
    %35 = arith.addf %34, %16 : vector<1x256xf32>
    %c0_26 = arith.constant 0 : index
    %c0_27 = arith.constant 0 : index
    %c0_28 = arith.constant 0 : index
    %c0_29 = arith.constant 0 : index
    %36 = vector.load %arg6[%c0_26, %c0_27, %c0_28, %c0_29] : memref<1x1x1x256xf32, #tpu.memory_space<vmem>>, vector<1x1x1x256xf32>
    %37 = vector.shape_cast %36 : vector<1x1x1x256xf32> to vector<1x256xf32>
    %38 = vector.shape_cast %35 : vector<1x256xf32> to vector<1x1x1x256xf32>
    tpu.vector_store %arg6[%c0_26, %c0_27, %c0_28, %c0_29], %38 {strides = array<i32>} : memref<1x1x1x256xf32, #tpu.memory_space<vmem>>, vector<1x1x1x256xf32>,
    return
  }
  func.func @transform_0(%arg0: i32, %arg1: i32) -> (i32, i32, i32) {
    %c0_i32 = arith.constant 0 : i32
    %c0_i32_0 = arith.constant 0 : i32
    return %arg0, %c0_i32, %arg1 : i32, i32, i32
  }
  func.func @transform_1(%arg0: i32, %arg1: i32) -> (i32, i32, i32) {
    %c0_i32 = arith.constant 0 : i32
    %c0_i32_0 = arith.constant 0 : i32
    return %arg0, %c0_i32, %arg1 : i32, i32, i32
  }
  func.func @transform_2(%arg0: i32, %arg1: i32) -> (i32, i32) {
    %c0_i32 = arith.constant 0 : i32
    %c0_i32_0 = arith.constant 0 : i32
    %c0_i32_1 = arith.constant 0 : i32
    return %c0_i32, %c0_i32_0 : i32, i32
  }
  func.func @transform_3(%arg0: i32, %arg1: i32) -> (i32, i32, i32, i32) {
    %c0_i32 = arith.constant 0 : i32
    %c0_i32_0 = arith.constant 0 : i32
    %c0_i32_1 = arith.constant 0 : i32
    %c0_i32_2 = arith.constant 0 : i32
    return %arg0, %c0_i32, %c0_i32_0, %c0_i32_1 : i32, i32, i32, i32
  }
  func.func @transform_4(%arg0: i32, %arg1: i32) -> (i32, i32, i32, i32) {
    %c0_i32 = arith.constant 0 : i32
    %c0_i32_0 = arith.constant 0 : i32
    %c0_i32_1 = arith.constant 0 : i32
    %c0_i32_2 = arith.constant 0 : i32
    return %arg0, %c0_i32, %c0_i32_0, %c0_i32_1 : i32, i32, i32, i32
  }
}

</mosaic_0001>

<llo_original>
// kernel: tpu_custom_call.1
$region0: #{tpu_custom_call.1}
  #allocation0 [shape = 'u32[]', space=smem, size = 0x4, offset = 0x4, fixed_abs, tag = 'smem constant byte address 0x4 - core index']
  #allocation1 [shape = 'u32[72,128]{1,0:T(1,128)}', space=vmem, size = 0x9000, scoped, tag = 'internal scratch']
  %s0 = inlined_call_operand.hbm [shape: f32[2,4,256], index: 0, kind: input, shape index: {}]
  %s1 = inlined_call_operand.vmem [shape: s32[2,1,256], index: 1, kind: input, shape index: {}]
  %s2 = inlined_call_operand.vmem [shape: f32[4,1], index: 2, kind: input, shape index: {}]
  %s3 = inlined_call_operand.hbm [shape: f32[2,1,1,256], index: 3, kind: output, shape index: {0}]
  %s4 = inlined_call_operand.hbm [shape: f32[2,1,1,256], index: 4, kind: output, shape index: {1}]
  %5 = xla_tuple %s3, %s4
  %s6 = sld [smem:[#allocation0]]
  $region61: #{tpu_custom_call.1} parent=0
    _
  %s8 = ssub.s32 1, %s6
  %s9 = scalar_select 0, %s8, %s6
  $region1: #{tpu_custom_call.1} parent=0
    #allocation2 [shape = 'u8[8192]{0}', space=vmem, size = 0x2000, scoped, tag = 'input window, operand 0']
    #allocation3 [shape = 's32[2]{0}', space=sflag, size = 0x8, scoped, tag = 'scoped memory for tpu_custom_call.1']
    #allocation4 [shape = 's32[2]{0}', space=sflag, size = 0x8, scoped, tag = 'scoped memory for tpu_custom_call.1']
    #allocation5 [shape = 'u8[2048]{0}', space=vmem, size = 0x800, scoped, tag = 'output window, operand 0']
    #allocation6 [shape = 'u8[2048]{0}', space=vmem, size = 0x800, scoped, tag = 'output window, operand 1']
    #allocation7 [shape = 's32[2]{0}', space=sflag, size = 0x8, scoped, tag = 'scoped memory for tpu_custom_call.1']
    %10 = vsyncpa [#allocation3], 0
    %s11 = scalar_lea.sflag [#allocation3], 1
    %12 = vsyncpa %s11, 0
    %13 = vsyncpa [#allocation4], 0
    %s14 = scalar_lea.sflag [#allocation4], 1
    %15 = vsyncpa %s14, 0
    %16 = vsyncpa [#allocation7], 0
    %s17 = scalar_lea.sflag [#allocation7], 1
    %18 = vsyncpa %s17, 0
    loop: start=0, step=1, limit=4
    $region2: #{tpu_custom_call.1} parent=1 // loop_pre_header
      _
    $region3: #{tpu_custom_call.1} parent=1 // loop_header
      %s20 = sphi 0, %s24
      %p21 = scmp.ge.s32.totalorder %s20, 4
      %s27 = sphi 0, %s39
      %s28 = sphi 0, %s35
      %s29 = sphi 0, %s27
      %s30 = sphi 0, %s28
      %s31 = sphi 0, %s29
      %s32 = sphi 0, %s30
      %s44 = sphi 0, %s46
      %s47 = sphi 0, %s44
      %s48 = sphi 0, %s47
      %s64 = sphi 0, %s48
      %s72 = sphi 0, %s74
      %s75 = sphi 0, %s72
      %s76 = sphi 0, %s75
      %s92 = sphi 0, %s76
      %s96 = sphi 0, %s96
      %s98 = sphi 0, %s96
      %s99 = sphi 0, %s98
      %s113 = sphi 0, %s99
      %s119 = sphi 0, %s121
      %s122 = sphi 0, %s119
      %s123 = sphi 0, %s122
      %s139 = sphi 0, %s123
      %s145 = sphi 0, %s147
      %s148 = sphi 0, %s145
      %s149 = sphi 0, %s148
      %s165 = sphi 0, %s149
    $region4: #{tpu_custom_call.1} parent=1 // loop_header_branch
      %23 = sbr.rel (%p21) target = $region8
    $region5: #{tpu_custom_call.1} parent=1 // loop_body
      %s25 = ssub.s32 %s20, 1
      %s26 = ssub.s32 %s20, 2
      %s33 = sadd.s32 1, %s28
      %p34 = scmp.ge.s32.totalorder %s33, 1
      %s35 = scalar_select %p34, 0, %s33
      %s36 = sadd.s32 1, %s27
      %s37 = scalar_select %p34, %s36, %s27
      %p38 = scmp.ge.s32.totalorder %s37, 2
      %s39 = scalar_select %p38, 0, %s37
      %s40 = ssub.s32 %s27, %s39
      %s41 = ssub.s32 %s28, %s35
      %s42 = sor.u32 %s40, %s41
      %p43 = scmp.eq.s32.totalorder %s42, 0
      %s45 = sadd.s32 %s44, 1
      %s46 = scalar_select %p43, %s44, %s45
      %p49 = pneg %p43
      %p50 = scmp.eq.s32.totalorder %s20, 1
      %p51 = por %p49, %p50
      %p52 = scmp.ne.s32.totalorder %s44, %s47
      %p53 = scmp.eq.s32.totalorder %s20, 0
      %p54 = por %p52, %p53
      %p55 = scmp.ne.s32.totalorder %s44, %s47
      %p56 = scmp.eq.s32.totalorder %s25, 1
      %p57 = por %p55, %p56
      %p58 = scmp.ne.s32.totalorder %s47, %s48
      %p59 = scmp.eq.s32.totalorder %s25, 0
      %p60 = por %p58, %p59
      %p61 = scmp.ne.s32.totalorder %s47, %s48
      %p62 = scmp.eq.s32.totalorder %s26, 1
      %p63 = por %p61, %p62
      %p65 = scmp.ne.s32.totalorder %s48, %s64
      %p66 = scmp.eq.s32.totalorder %s26, 0
      %p67 = por %p65, %p66
      %s68 = ssub.s32 %s27, %s39
      %s69 = ssub.s32 %s28, %s35
      %s70 = sor.u32 %s68, %s69
      %p71 = scmp.eq.s32.totalorder %s70, 0
      %s73 = sadd.s32 %s72, 1
      %s74 = scalar_select %p71, %s72, %s73
      %p77 = pneg %p71
      %p78 = scmp.eq.s32.totalorder %s20, 1
      %p79 = por %p77, %p78
      %p80 = scmp.ne.s32.totalorder %s72, %s75
      %p81 = scmp.eq.s32.totalorder %s20, 0
      %p82 = por %p80, %p81
      %p83 = scmp.ne.s32.totalorder %s72, %s75
      %p84 = scmp.eq.s32.totalorder %s25, 1
      %p85 = por %p83, %p84
      %p86 = scmp.ne.s32.totalorder %s75, %s76
      %p87 = scmp.eq.s32.totalorder %s25, 0
      %p88 = por %p86, %p87
      %p89 = scmp.ne.s32.totalorder %s75, %s76
      %p90 = scmp.eq.s32.totalorder %s26, 1
      %p91 = por %p89, %p90
      %p93 = scmp.ne.s32.totalorder %s76, %s92
      %p94 = scmp.eq.s32.totalorder %s26, 0
      %p95 = por %p93, %p94
      %s97 = sadd.s32 %s96, 1
      %p100 = scmp.eq.s32.totalorder %s20, 1
      %p101 = scmp.ne.s32.totalorder %s96, %s98
      %p102 = scmp.eq.s32.totalorder %s20, 0
      %p103 = por %p101, %p102
      %p104 = scmp.ne.s32.totalorder %s96, %s98
      %p105 = scmp.eq.s32.totalorder %s25, 1
      %p106 = por %p104, %p105
      %p107 = scmp.ne.s32.totalorder %s98, %s99
      %p108 = scmp.eq.s32.totalorder %s25, 0
      %p109 = por %p107, %p108
      %p110 = scmp.ne.s32.totalorder %s98, %s99
      %p111 = scmp.eq.s32.totalorder %s26, 1
      %p112 = por %p110, %p111
      %p114 = scmp.ne.s32.totalorder %s99, %s113
      %p115 = scmp.eq.s32.totalorder %s26, 0
      %p116 = por %p114, %p115
      %s117 = ssub.s32 %s27, %s39
      %p118 = scmp.eq.s32.totalorder %s117, 0
      %s120 = sadd.s32 %s119, 1
      %s121 = scalar_select %p118, %s119, %s120
      %p124 = pneg %p118
      %p125 = scmp.eq.s32.totalorder %s20, 1
      %p126 = por %p124, %p125
      %p127 = scmp.ne.s32.totalorder %s119, %s122
      %p128 = scmp.eq.s32.totalorder %s20, 0
      %p129 = por %p127, %p128
      %p130 = scmp.ne.s32.totalorder %s119, %s122
      %p131 = scmp.eq.s32.totalorder %s25, 1
      %p132 = por %p130, %p131
      %p133 = scmp.ne.s32.totalorder %s122, %s123
      %p134 = scmp.eq.s32.totalorder %s25, 0
      %p135 = por %p133, %p134
      %p136 = scmp.ne.s32.totalorder %s122, %s123
      %p137 = scmp.eq.s32.totalorder %s26, 1
      %p138 = por %p136, %p137
      %p140 = scmp.ne.s32.totalorder %s123, %s139
      %p141 = scmp.eq.s32.totalorder %s26, 0
      %p142 = por %p140, %p141
      %s143 = ssub.s32 %s27, %s39
      %p144 = scmp.eq.s32.totalorder %s143, 0
      %s146 = sadd.s32 %s145, 1
      %s147 = scalar_select %p144, %s145, %s146
      %p150 = pneg %p144
      %p151 = scmp.eq.s32.totalorder %s20, 1
      %p152 = por %p150, %p151
      %p153 = scmp.ne.s32.totalorder %s145, %s148
      %p154 = scmp.eq.s32.totalorder %s20, 0
      %p155 = por %p153, %p154
      %p156 = scmp.ne.s32.totalorder %s145, %s148
      %p157 = scmp.eq.s32.totalorder %s25, 1
      %p158 = por %p156, %p157
      %p159 = scmp.ne.s32.totalorder %s148, %s149
      %p160 = scmp.eq.s32.totalorder %s25, 0
      %p161 = por %p159, %p160
      %p162 = scmp.ne.s32.totalorder %s148, %s149
      %p163 = scmp.eq.s32.totalorder %s26, 1
      %p164 = por %p162, %p163
      %p166 = scmp.ne.s32.totalorder %s149, %s165
      %p167 = scmp.eq.s32.totalorder %s26, 0
      %p168 = por %p166, %p167
      %p169 = scmp.le.s32.totalorder 1, %s20
      %p170 = scmp.lt.s32.totalorder %s20, 3
      %p171 = pnand %p169, %p170
      %p172 = pneg %p171
      // Predicated region
      $region9: #{tpu_custom_call.1} parent=5 // pred_check
        _
      $region10: #{tpu_custom_call.1} parent=5 // pred_check_branch
        %174 = sbr.rel (%p171) target = $region12
      $region11: #{tpu_custom_call.1} parent=5 // pred_region
        %s175 = ssub.s32 %s20, 1
        // Predicated region
        $region13: #{tpu_custom_call.1} parent=11 // pred_check
          %p176 = pneg %p109
        $region14: #{tpu_custom_call.1} parent=11 // pred_check_branch
          %178 = sbr.rel (%p176) target = $region16
        $region15: #{tpu_custom_call.1} parent=11 // pred_region
          _
        $region16: #{tpu_custom_call.1} parent=11 // pred_fallthru
          _
      $region12: #{tpu_custom_call.1} parent=5 // pred_fallthru
        _
      %p179 = scmp.lt.s32.totalorder %s20, 2
      // Predicated region
      $region17: #{tpu_custom_call.1} parent=5 // pred_check
        %p180 = pneg %p179
      $region18: #{tpu_custom_call.1} parent=5 // pred_check_branch
        %182 = sbr.rel (%p180) target = $region20
      $region19: #{tpu_custom_call.1} parent=5 // pred_region
        // Predicated region
        $region21: #{tpu_custom_call.1} parent=19 // pred_check
          %p183 = pneg %p54
        $region22: #{tpu_custom_call.1} parent=19 // pred_check_branch
          %185 = sbr.rel (%p183) target = $region24
        $region23: #{tpu_custom_call.1} parent=19 // pred_region
          %s186 = sand.u32 %s44, 1
          %s187 = scalar_lea.sflag [#allocation3], %s186
          %s188 = sand.u32 %s44, 1
          %s189 = smul.addr %s188, 8
          %s190 = scalar_lea.vmem [#allocation2], %s189
          %s191 = smul.u32 2, %s28
          %193 = vsyncadd %s187, 0
          %s194 = smul.addr %s27, 2
          %s195 = sadd.s32 %s191, %s194
          %s196 = smul.addr %s195, 4
          %s197 = scalar_lea.hbm %s0, %s196
          %s199 = sshll.u32 %s197, 4
          %s200 = int_to_ptr.hbm [resolvable:$true] %s199
          %s201 = sshll.u32 %s190, 4
          %s202 = int_to_ptr.vmem [resolvable:$true] %s201
          %204 = dma.hbm_to_vmem [thread:$0]  %s200, 128, %s202, %s187
        $region24: #{tpu_custom_call.1} parent=19 // pred_fallthru
          _
        // Predicated region
        $region25: #{tpu_custom_call.1} parent=19 // pred_check
          %p205 = pneg %p82
        $region26: #{tpu_custom_call.1} parent=19 // pred_check_branch
          %207 = sbr.rel (%p205) target = $region28
        $region27: #{tpu_custom_call.1} parent=19 // pred_region
          %s208 = smul.u32 2, %s28
          %p209 = scmp.lt.s32.totalorder %s27, 1
          %s210 = scalar_select %p209, %s27, 1
          %p211 = scmp.lt.s32.totalorder %s208, 1
          %s212 = scalar_select %p211, %s208, 1
          %s213 = smul.addr %s210, 2
          %s214 = sadd.s32 %s212, %s213
          %s215 = scalar_lea.vmem %s1, %s214
          %s216 = smul.u32 2, %s28
        $region28: #{tpu_custom_call.1} parent=19 // pred_fallthru
          _
      $region20: #{tpu_custom_call.1} parent=5 // pred_fallthru
        _
      %p217 = scmp.le.s32.totalorder 1, %s20
      %p218 = scmp.lt.s32.totalorder %s20, 3
      %p219 = pnand %p217, %p218
      %p220 = pneg %p219
      // Predicated region
      $region29: #{tpu_custom_call.1} parent=5 // pred_check
        _
      $region30: #{tpu_custom_call.1} parent=5 // pred_check_branch
        %222 = sbr.rel (%p219) target = $region32
      $region31: #{tpu_custom_call.1} parent=5 // pred_region
        %s223 = ssub.s32 %s20, 1
        %s224 = sand.u32 %s47, 1
        %s225 = scalar_lea.sflag [#allocation3], %s224
        %s226 = sand.u32 %s47, 1
        %s227 = smul.addr %s226, 8
        %s228 = scalar_lea.vmem [#allocation2], %s227
        // Predicated region
        $region33: #{tpu_custom_call.1} parent=31 // pred_check
          %p229 = pneg %p60
        $region34: #{tpu_custom_call.1} parent=31 // pred_check_branch
          %231 = sbr.rel (%p229) target = $region36
        $region35: #{tpu_custom_call.1} parent=31 // pred_region
          %233 = dma.done %s225, 128
        $region36: #{tpu_custom_call.1} parent=31 // pred_fallthru
          _
        %s234 = sand.u32 %s47, 1
        %s235 = scalar_lea.sflag [#allocation3], %s234
        %s236 = sand.u32 %s47, 1
        %s237 = smul.addr %s236, 8
        %s238 = scalar_lea.vmem [#allocation2], %s237
        %p239 = pneg %p60
        %p240 = pneg %p57
        %s241 = smul.u32 2, %s30
        %p242 = scmp.lt.s32.totalorder %s29, 1
        %s243 = scalar_select %p242, %s29, 1
        %p244 = scmp.lt.s32.totalorder %s241, 1
        %s245 = scalar_select %p244, %s241, 1
        %s246 = smul.addr %s243, 2
        %s247 = sadd.s32 %s245, %s246
        %s248 = scalar_lea.vmem %s1, %s247
        %p249 = pneg %p88
        %p250 = pneg %p85
        %p251 = pneg %p109
        %p252 = pneg %p106
        %p253 = pneg %p135
        %p254 = pneg %p132
        %s255 = sand.u32 %s122, 1
        %s256 = scalar_lea.sflag [#allocation4], %s255
        %s257 = sand.u32 %s122, 1
        %s258 = smul.addr %s257, 2
        %s259 = scalar_lea.vmem [#allocation5], %s258
        %p260 = pneg %p161
        %p261 = pneg %p158
        %s262 = sand.u32 %s148, 1
        %s263 = scalar_lea.sflag [#allocation7], %s262
        %s264 = sand.u32 %s148, 1
        %s265 = smul.addr %s264, 2
        %s266 = scalar_lea.vmem [#allocation6], %s265
        %s267 = smul.u32 2, %s30
        %s268 = smul.u32 2, %s30
        %p269 = scmp.lt.s32.totalorder %s29, 1
        %s270 = scalar_select %p269, %s29, 1
        %p271 = scmp.lt.s32.totalorder %s268, 1
        %s272 = scalar_select %p271, %s268, 1
        %s273 = smul.addr %s270, 2
        %s274 = sadd.s32 %s272, %s273
        %s275 = scalar_lea.vmem %s1, %s274
        %s276 = smul.u32 2, %s30
        %p277 = scmp.eq.s32.totalorder %s30, 0
        // Predicated region
        $region37: #{tpu_custom_call.1} parent=31 // pred_check
          %p278 = pneg %p277
        $region38: #{tpu_custom_call.1} parent=31 // pred_check_branch
          %280 = sbr.rel (%p278) target = $region40
        $region39: #{tpu_custom_call.1} parent=31 // pred_region
          %v281 = vlaneseq
          %vm282 = vcmp.ge.s32.totalorder %v281, 0
          %vm283 = vcmp.lt.s32.totalorder %v281, 256
          %vm284 = vmand %vm282, %vm283
          %285 = vst.msk [vmem:[%s259] sm:$0x3] %vm284, 0.0
          %286 = vst.msk [vmem:[%s266] sm:$0x3] %vm284, 0.0
        $region40: #{tpu_custom_call.1} parent=31 // pred_fallthru
          _
        %v287 = vld [vmem:[%s228] sm:$0xff]
        %v288 = vld [vmem:[%s275] sm:$0x3]
        %v289 = vld [vmem:[%s2] sm:$0xf]
        %v290 = vlaneseq
        %v291 = vshrl.u32 %v290, 7
        %v292 = vperm.slane %v288, 0
        %v293 = vperm.slane %v288, 1
        %vm294 = vcmp.eq.s32.totalorder %v291, %v292
        %vm295 = vcmp.eq.s32.totalorder %v291, %v293
        %297 = vst [vmem:[#allocation1] ss:$2 sm:$0xff] %v287
        %v298 = vld.sshfl [vmem:[#allocation1] sm:$0xff pattern:$0x75316420]
        %v299 = vld.sshfl [vmem:[#allocation1 + $0x8] sm:$0xff pattern:$0x75316420]
        %v302 = vsel %vm294, %v298, 0.0
        %v303 = vsel %vm295, %v299, 0.0
        %vm304 = vcmask 1043456
        %v305 = vsel %vm304, %v302, 0.0
        %v306 = vrot.slane %v305, 4
        %v307 = vadd.f32 %v305, %v306
        %v308 = vrot.slane %v307, 2
        %v309 = vadd.f32 %v307, %v308
        %v310 = vrot.slane %v309, 1
        %v311 = vadd.f32 %v309, %v310
        %v312 = vsel %vm304, %v303, 0.0
        %v313 = vrot.slane %v312, 4
        %v314 = vadd.f32 %v312, %v313
        %v315 = vrot.slane %v314, 2
        %v316 = vadd.f32 %v314, %v315
        %v317 = vrot.slane %v316, 1
        %v318 = vadd.f32 %v316, %v317
        %320 = vset.pattern.permute.xlu0 0
        %321 = vperm.xlu0 %320, %v289
        %v322 = vpop.permute.xlu0 %321
        %v324 = vsel %vm294, %v322, 0.0
        %v325 = vsel %vm295, %v322, 0.0
        %v326 = vsel %vm304, %v324, 0.0
        %v327 = vrot.slane %v326, 4
        %v328 = vadd.f32 %v326, %v327
        %v329 = vrot.slane %v328, 2
        %v330 = vadd.f32 %v328, %v329
        %v331 = vrot.slane %v330, 1
        %v332 = vadd.f32 %v330, %v331
        %v333 = vsel %vm304, %v325, 0.0
        %v334 = vrot.slane %v333, 4
        %v335 = vadd.f32 %v333, %v334
        %v336 = vrot.slane %v335, 2
        %v337 = vadd.f32 %v335, %v336
        %v338 = vrot.slane %v337, 1
        %v339 = vadd.f32 %v337, %v338
        %v340 = vmul.f32 %v311, 1.442695
        %v341 = vpow.pop %v340
        %v342 = vmul.f32 %v318, 1.442695
        %v343 = vpow.pop %v342
        %v344 = vsub.f32 1.0, %v341
        %v345 = vsub.f32 1.0, %v343
        %v346 = vmax.f32 %v344, 0.0
        %v347 = vmax.f32 %v345, 0.0
        %v348 = vmul.f32 %v346, %v346
        %v349 = vmul.f32 %v347, %v347
        %v350 = vmul.f32 %v348, %v311
        %v351 = vmul.f32 %v349, %v318
        %v352 = vld [vmem:[%s259] sm:$0x3]
        %v353 = vsub.f32 0.0, %v332
        %v354 = vsub.f32 0.0, %v339
        %v355 = vmul.f32 %v353, %v350
        %v356 = vmul.f32 %v354, %v351
        %v359 = vrot.slane %v356, 7
        %vm360 = vcmask 1040384
        %v361 = vsel %vm360, %v355, %v359
        %v363 = vadd.f32 %v352, %v361
        %v364 = vlaneseq
        %vm365 = vcmp.ge.s32.totalorder %v364, 0
        %vm366 = vcmp.lt.s32.totalorder %v364, 256
        %vm367 = vmand %vm365, %vm366
        %368 = vst.msk [vmem:[%s259] sm:$0x3] %vm367, %v363
        %v369 = vld [vmem:[%s266] sm:$0x3]
        %v372 = vrot.slane %v339, 7
        %v373 = vsel %vm360, %v332, %v372
        %v375 = vadd.f32 %v369, %v373
        %376 = vst.msk [vmem:[%s266] sm:$0x3] %vm367, %v375
        %s377 = sand.u32 %s122, 1
        %s378 = scalar_lea.sflag [#allocation4], %s377
        %s379 = sand.u32 %s122, 1
        %s380 = smul.addr %s379, 2
        %s381 = scalar_lea.vmem [#allocation5], %s380
        %s382 = sand.u32 %s148, 1
        %s383 = scalar_lea.sflag [#allocation7], %s382
        %s384 = sand.u32 %s148, 1
        %s385 = smul.addr %s384, 2
        %s386 = scalar_lea.vmem [#allocation6], %s385
        // Predicated region
        $region41: #{tpu_custom_call.1} parent=31 // pred_check
          %p387 = pneg %p132
        $region42: #{tpu_custom_call.1} parent=31 // pred_check_branch
          %389 = sbr.rel (%p387) target = $region44
        $region43: #{tpu_custom_call.1} parent=31 // pred_region
          %391 = vsyncadd %s378, 0
          %s392 = smul.addr %s29, 2
          %s393 = scalar_lea.hbm %s3, %s392
          %s395 = sshll.u32 %s381, 4
          %s396 = int_to_ptr.vmem [resolvable:$true] %s395
          %s397 = sshll.u32 %s393, 4
          %s398 = int_to_ptr.hbm [resolvable:$true] %s397
          %400 = dma.vmem_to_hbm [thread:$0]  %s396, 32, %s398, %s378
        $region44: #{tpu_custom_call.1} parent=31 // pred_fallthru
          _
        // Predicated region
        $region45: #{tpu_custom_call.1} parent=31 // pred_check
          %p401 = pneg %p158
        $region46: #{tpu_custom_call.1} parent=31 // pred_check_branch
          %403 = sbr.rel (%p401) target = $region48
        $region47: #{tpu_custom_call.1} parent=31 // pred_region
          %405 = vsyncadd %s383, 0
          %s406 = smul.addr %s29, 2
          %s407 = scalar_lea.hbm %s4, %s406
          %s409 = sshll.u32 %s386, 4
          %s410 = int_to_ptr.vmem [resolvable:$true] %s409
          %s411 = sshll.u32 %s407, 4
          %s412 = int_to_ptr.hbm [resolvable:$true] %s411
          %414 = dma.vmem_to_hbm [thread:$0]  %s410, 32, %s412, %s383
        $region48: #{tpu_custom_call.1} parent=31 // pred_fallthru
          _
      $region32: #{tpu_custom_call.1} parent=5 // pred_fallthru
        _
      %p415 = scmp.le.s32.totalorder 2, %s20
      // Predicated region
      $region49: #{tpu_custom_call.1} parent=5 // pred_check
        %p416 = pneg %p415
      $region50: #{tpu_custom_call.1} parent=5 // pred_check_branch
        %418 = sbr.rel (%p416) target = $region52
      $region51: #{tpu_custom_call.1} parent=5 // pred_region
        %s419 = ssub.s32 %s20, 2
        // Predicated region
        $region53: #{tpu_custom_call.1} parent=51 // pred_check
          %p420 = pneg %p138
        $region54: #{tpu_custom_call.1} parent=51 // pred_check_branch
          %422 = sbr.rel (%p420) target = $region56
        $region55: #{tpu_custom_call.1} parent=51 // pred_region
          %s423 = sand.u32 %s123, 1
          %s424 = scalar_lea.sflag [#allocation4], %s423
          %s425 = sand.u32 %s123, 1
          %s426 = smul.addr %s425, 2
          %s427 = scalar_lea.vmem [#allocation5], %s426
          %429 = dma.done %s424, 32
        $region56: #{tpu_custom_call.1} parent=51 // pred_fallthru
          _
        // Predicated region
        $region57: #{tpu_custom_call.1} parent=51 // pred_check
          %p430 = pneg %p164
        $region58: #{tpu_custom_call.1} parent=51 // pred_check_branch
          %432 = sbr.rel (%p430) target = $region60
        $region59: #{tpu_custom_call.1} parent=51 // pred_region
          %s433 = sand.u32 %s149, 1
          %s434 = scalar_lea.sflag [#allocation7], %s433
          %s435 = sand.u32 %s149, 1
          %s436 = smul.addr %s435, 2
          %s437 = scalar_lea.vmem [#allocation6], %s436
          %439 = dma.done %s434, 32
        $region60: #{tpu_custom_call.1} parent=51 // pred_fallthru
          _
      $region52: #{tpu_custom_call.1} parent=5 // pred_fallthru
        _
    $region6: #{tpu_custom_call.1} parent=1 // loop_footer
      %s24 = sadd.s32 1, %s20
    $region7: #{tpu_custom_call.1} parent=1 // loop_footer_branch
      %19 = sbr.rel target = $region3
    $region8: #{tpu_custom_call.1} parent=1 // loop_exit
      _
    %440 = vsyncpa [#allocation3], 1
    %s441 = scalar_lea.sflag [#allocation3], 1
    %442 = vsyncpa %s441, 1
    %443 = vsyncpa [#allocation4], 1
    %s444 = scalar_lea.sflag [#allocation4], 1
    %445 = vsyncpa %s444, 1
    %446 = vsyncpa [#allocation7], 1
    %s447 = scalar_lea.sflag [#allocation7], 1
    %448 = vsyncpa %s447, 1

</llo_original>
